<compile_context>
chip_gen: v7x
topology: tpu7x:2x2x1
jax: 0.10.0
libtpu: 0.0.40
codegen_flags: <defaults>
</compile_context>

<pallas_src>
import functools

import jax
import jax.numpy as jnp
from jax.experimental import pallas as pl
from jax.experimental.pallas import tpu as pltpu

NUM_DICE_FACE = 6                 # matches module-level constant in the source
IN_DIM = NUM_DICE_FACE * 2        # 12
H1 = 64
H2 = 128
OUT_DIM = NUM_DICE_FACE           # 6
BN_EPS = 1e-5

MAX_TILE_B = 2048                 # rows per grid step (multiple of 8)
SMALL_BATCH_FASTPATH = 512        # below this, skip pallas_call (dispatch-bound)


# ---------------------------------------------------------------------------
# Kernel: one batch tile, full fused MLP (BN already folded into w/b).
# ---------------------------------------------------------------------------
def dqn_kernel(x_ref, w1_ref, b1_ref, w2_ref, b2_ref, w3_ref, b3_ref, out_ref):
    wdt = w1_ref.dtype                                   # f32 or bf16 weights

    x = x_ref[...].astype(wdt)                                        # (T, 12)
    h = jnp.dot(x, w1_ref[...], preferred_element_type=jnp.float32) + b1_ref[...]
    h = jnp.maximum(h, 0.0)                                           # (T, 64)

    h = jnp.dot(h.astype(wdt), w2_ref[...],
                preferred_element_type=jnp.float32) + b2_ref[...]
    h = jnp.maximum(h, 0.0)                                           # (T, 128)

    out_ref[...] = (jnp.dot(h.astype(wdt), w3_ref[...],
                            preferred_element_type=jnp.float32)
                    + b3_ref[...])                                    # (T, 6)


def _round_up(n, m):
    return ((n + m - 1) // m) * m


def _cdiv(a, b):
    return -(-a // b)


@functools.partial(jax.jit, static_argnames=("max_tile_b", "min_pallas_batch"))
def dqn_forward(x, folded, max_tile_b=MAX_TILE_B,
                min_pallas_batch=SMALL_BATCH_FASTPATH):
    """x: (B, 12) float32.  folded: dict w1,b1,w2,b2,w3,b3 (BN pre-folded)."""
    B = x.shape[0]
    wdt = folded["w1"].dtype

    # --- small-batch fast path: XLA fuses these trivially; skip kernel
    #     dispatch / grid overhead entirely. -------------------------------
    if B < min_pallas_batch:
        h = jnp.maximum(
            jnp.dot(x.astype(wdt), folded["w1"],
                    preferred_element_type=jnp.float32) + folded["b1"], 0.0)
        h = jnp.maximum(
            jnp.dot(h.astype(wdt), folded["w2"],
                    preferred_element_type=jnp.float32) + folded["b2"], 0.0)
        return (jnp.dot(h.astype(wdt), folded["w3"],
                        preferred_element_type=jnp.float32) + folded["b3"])

    # --- tile / grid selection -------------------------------------------
    # Pad only to a multiple of 8 (f32 sublane), then split into as few
    # tiles as possible subject to: tile <= max_tile_b, and n_tiles >= 2
    # (even) when the batch allows, so v7x can use both TensorCores.
    pad8 = _round_up(B, 8)
    n_tiles = max(_cdiv(pad8, max_tile_b), 1)
    if pad8 >= 16:
        n_tiles = max(n_tiles, 2)
    if n_tiles > 1 and (n_tiles % 2):
        n_tiles += 1
    tile = _round_up(_cdiv(pad8, n_tiles), 8)
    padded_b = n_tiles * tile                       # waste < 8 * n_tiles rows

    if padded_b != B:
        x = jnp.pad(x, ((0, padded_b - B), (0, 0)))

    # Batch-tiled specs for x / out; resident full-shape blocks for params
    # (total weights < 70 KiB, they stay pinned in VMEM across grid steps).
    x_spec = pl.BlockSpec((tile, IN_DIM), lambda i: (i, 0))
    out_spec = pl.BlockSpec((tile, OUT_DIM), lambda i: (i, 0))

    def resident(shape):
        return pl.BlockSpec(shape, lambda i: (0, 0))

    # Advisory cost estimate for XLA's scheduler.
    bpe_w = jnp.dtype(wdt).itemsize
    flops = 2 * padded_b * (IN_DIM * H1 + H1 * H2 + H2 * OUT_DIM)
    bytes_accessed = (padded_b * (IN_DIM + OUT_DIM) * 4
                      + (IN_DIM * H1 + H1 * H2 + H2 * OUT_DIM) * bpe_w
                      + (H1 + H2 + OUT_DIM) * 4)
    cost = pl.CostEstimate(flops=flops, transcendentals=0,
                           bytes_accessed=bytes_accessed)

    out = pl.pallas_call(
        dqn_kernel,
        out_shape=jax.ShapeDtypeStruct((padded_b, OUT_DIM), jnp.float32),
        grid=(n_tiles,),
        in_specs=[
            x_spec,
            resident((IN_DIM, H1)), resident((1, H1)),
            resident((H1, H2)),     resident((1, H2)),
            resident((H2, OUT_DIM)), resident((1, OUT_DIM)),
        ],
        out_specs=out_spec,
        compiler_params=pltpu.CompilerParams(
            dimension_semantics=("parallel",),
            vmem_limit_bytes=32 * 1024 * 1024),
        cost_estimate=cost,
    )(x, folded["w1"], folded["b1"], folded["w2"], folded["b2"],
      folded["w3"], folded["b3"])

    return out[:B]


# ---------------------------------------------------------------------------
# Parameter construction / BN folding (done once, outside the kernel path).
# ---------------------------------------------------------------------------
def init_params(key):
    """Deterministic synthetic params (PyTorch-like uniform fan-in init)."""
    ks = jax.random.split(key, 6)

    def linear(kw, kb, fan_in, fan_out):
        bound = 1.0 / jnp.sqrt(fan_in)
        w = jax.random.uniform(kw, (fan_in, fan_out), jnp.float32, -bound, bound)
        b = jax.random.uniform(kb, (1, fan_out), jnp.float32, -bound, bound)
        return w, b

    w1, b1 = linear(ks[0], ks[1], IN_DIM, H1)
    w2, b2 = linear(ks[2], ks[3], H1, H2)
    w3, b3 = linear(ks[4], ks[5], H2, OUT_DIM)

    # BatchNorm1d at PyTorch init: gamma=1, beta=0, running_mean=0, running_var=1.
    return dict(
        w1=w1, b1=b1,
        g1=jnp.ones((1, H1), jnp.float32), beta1=jnp.zeros((1, H1), jnp.float32),
        m1=jnp.zeros((1, H1), jnp.float32), v1=jnp.ones((1, H1), jnp.float32),
        w2=w2, b2=b2,
        g2=jnp.ones((1, H2), jnp.float32), beta2=jnp.zeros((1, H2), jnp.float32),
        m2=jnp.zeros((1, H2), jnp.float32), v2=jnp.ones((1, H2), jnp.float32),
        w3=w3, b3=b3,
    )


def fold_bn_params(p, weight_dtype=jnp.float32):
    """Fold eval-mode BN into the preceding Linear.  Call once at load time.

    weight_dtype=jnp.bfloat16 enables the native bf16 MXU path on v5e/v6e/v7x
    (biases stay f32; the kernel accumulates in f32).
    """
    s1 = p["g1"] * jax.lax.rsqrt(p["v1"] + BN_EPS)          # (1, H1)
    s2 = p["g2"] * jax.lax.rsqrt(p["v2"] + BN_EPS)          # (1, H2)
    return dict(
        w1=(p["w1"] * s1).astype(weight_dtype),             # (IN_DIM, H1) * row
        b1=(p["b1"] - p["m1"]) * s1 + p["beta1"],
        w2=(p["w2"] * s2).astype(weight_dtype),
        b2=(p["b2"] - p["m2"]) * s2 + p["beta2"],
        w3=p["w3"].astype(weight_dtype),
        b3=p["b3"],
    )


def dqn_reference(x, p):
    """Pure-JAX reference of the original (unfolded) forward, eval-mode BN."""
    h = x @ p["w1"] + p["b1"]
    h = (h - p["m1"]) * (p["g1"] / jnp.sqrt(p["v1"] + BN_EPS)) + p["beta1"]
    h = jnp.maximum(h, 0.0)
    h = h @ p["w2"] + p["b2"]
    h = (h - p["m2"]) * (p["g2"] / jnp.sqrt(p["v2"] + BN_EPS)) + p["beta2"]
    h = jnp.maximum(h, 0.0)
    return h @ p["w3"] + p["b3"]


if __name__ == "__main__":
    key = jax.random.PRNGKey(0)
    kx, kp = jax.random.split(key)

    params = init_params(kp)
    folded_f32 = fold_bn_params(params)                  # one-time fold (f32)
    folded_bf16 = fold_bn_params(params, jnp.bfloat16)   # optional bf16 weights

    # --- small demo batch, forced through the Pallas kernel path ----------
    batch = 2
    x = jax.random.normal(kx, (batch, IN_DIM), jnp.float32)
    out = jax.block_until_ready(dqn_forward(x, folded_f32, min_pallas_batch=0))
    ref = dqn_reference(x, params)
    assert out.shape == (batch, OUT_DIM)
    assert jnp.allclose(out, ref, atol=1e-5, rtol=1e-5)

    # --- small batch via the default fast path (no pallas_call) -----------
    xs = jax.random.normal(kx, (16, IN_DIM), jnp.float32)
    os_ = jax.block_until_ready(dqn_forward(xs, folded_f32))
    assert jnp.allclose(os_, dqn_reference(xs, params), atol=1e-5, rtol=1e-5)

    # --- larger, non-multiple batch: exercises padding + multi-tile grid --
    big = 1030
    xb = jax.random.normal(kx, (big, IN_DIM), jnp.float32)
    ob = jax.block_until_ready(dqn_forward(xb, folded_f32))
    rb = dqn_reference(xb, params)
    assert ob.shape == (big, OUT_DIM)
    assert jnp.allclose(ob, rb, atol=1e-4, rtol=1e-4)

    # --- bf16-weight path (looser tolerance; f32 accumulation) ------------
    ob16 = jax.block_until_ready(dqn_forward(xb, folded_bf16))
    assert ob16.shape == (big, OUT_DIM)
    assert jnp.allclose(ob16, rb, atol=5e-2, rtol=5e-2)

    print("KERNEL_OK")
</pallas_src>

<mosaic_0001>
module attributes {stable_mosaic.version = 11 : i64} {
  func.func @dqn_kernel(%arg0: i32, %arg1: memref<8x12xf32, #tpu.memory_space<vmem>>, %arg2: memref<12x64xf32, #tpu.memory_space<vmem>>, %arg3: memref<1x64xf32, #tpu.memory_space<vmem>>, %arg4: memref<64x128xf32, #tpu.memory_space<vmem>>, %arg5: memref<1x128xf32, #tpu.memory_space<vmem>>, %arg6: memref<128x6xf32, #tpu.memory_space<vmem>>, %arg7: memref<1x6xf32, #tpu.memory_space<vmem>>, %arg8: memref<8x6xf32, #tpu.memory_space<vmem>>) attributes {dimension_semantics = [#tpu.dimension_semantics<parallel>], iteration_bounds = array<i64: 1>, scalar_prefetch = 0 : i64, scratch_operands = 0 : i64, tpu.core_type = #tpu.core_type<tc>, window_params = [{transform_indices = @transform_0, window_bounds = array<i64: 8, 12>}, {pipeline_mode = #tpu.pipeline_mode<synchronous>, transform_indices = @transform_1, window_bounds = array<i64: 12, 64>}, {pipeline_mode = #tpu.pipeline_mode<synchronous>, transform_indices = @transform_2, window_bounds = array<i64: 1, 64>}, {pipeline_mode = #tpu.pipeline_mode<synchronous>, transform_indices = @transform_3, window_bounds = array<i64: 64, 128>}, {pipeline_mode = #tpu.pipeline_mode<synchronous>, transform_indices = @transform_4, window_bounds = array<i64: 1, 128>}, {pipeline_mode = #tpu.pipeline_mode<synchronous>, transform_indices = @transform_5, window_bounds = array<i64: 128, 6>}, {pipeline_mode = #tpu.pipeline_mode<synchronous>, transform_indices = @transform_6, window_bounds = array<i64: 1, 6>}, {transform_indices = @transform_7, window_bounds = array<i64: 8, 6>}]} {
    %c0 = arith.constant 0 : index
    %c0_0 = arith.constant 0 : index
    %0 = vector.load %arg1[%c0, %c0_0] : memref<8x12xf32, #tpu.memory_space<vmem>>, vector<8x12xf32>
    %c0_1 = arith.constant 0 : index
    %c0_2 = arith.constant 0 : index
    %1 = vector.load %arg2[%c0_1, %c0_2] : memref<12x64xf32, #tpu.memory_space<vmem>>, vector<12x64xf32>
    %cst = arith.constant dense<0.000000e+00> : vector<8x64xf32>
    %2 = tpu.matmul %0, %1, %cst {dimension_numbers = #tpu.dot_dimension_numbers<[1], [0], [0], [1], [0, 0, 1, 1], [], []>} : vector<8x12xf32>, vector<12x64xf32>, vector<8x64xf32> -> vector<8x64xf32>
    %c0_3 = arith.constant 0 : index
    %c0_4 = arith.constant 0 : index
    %3 = vector.load %arg3[%c0_3, %c0_4] : memref<1x64xf32, #tpu.memory_space<vmem>>, vector<1x64xf32>
    %4 = vector.broadcast %3 : vector<1x64xf32> to vector<8x64xf32>
    %5 = arith.addf %2, %4 : vector<8x64xf32>
    %cst_5 = arith.constant 0.000000e+00 : f32
    %6 = vector.broadcast %cst_5 : f32 to vector<8x64xf32>
    %7 = arith.maximumf %5, %6 : vector<8x64xf32>
    %c0_6 = arith.constant 0 : index
    %c0_7 = arith.constant 0 : index
    %8 = vector.load %arg4[%c0_6, %c0_7] : memref<64x128xf32, #tpu.memory_space<vmem>>, vector<64x128xf32>
    %cst_8 = arith.constant dense<0.000000e+00> : vector<8x128xf32>
    %9 = tpu.matmul %7, %8, %cst_8 {dimension_numbers = #tpu.dot_dimension_numbers<[1], [0], [0], [1], [0, 0, 1, 1], [], []>} : vector<8x64xf32>, vector<64x128xf32>, vector<8x128xf32> -> vector<8x128xf32>
    %c0_9 = arith.constant 0 : index
    %c0_10 = arith.constant 0 : index
    %10 = vector.load %arg5[%c0_9, %c0_10] : memref<1x128xf32, #tpu.memory_space<vmem>>, vector<1x128xf32>
    %11 = vector.broadcast %10 : vector<1x128xf32> to vector<8x128xf32>
    %12 = arith.addf %9, %11 : vector<8x128xf32>
    %cst_11 = arith.constant 0.000000e+00 : f32
    %13 = vector.broadcast %cst_11 : f32 to vector<8x128xf32>
    %14 = arith.maximumf %12, %13 : vector<8x128xf32>
    %c0_12 = arith.constant 0 : index
    %c0_13 = arith.constant 0 : index
    %15 = vector.load %arg6[%c0_12, %c0_13] : memref<128x6xf32, #tpu.memory_space<vmem>>, vector<128x6xf32>
    %cst_14 = arith.constant dense<0.000000e+00> : vector<8x6xf32>
    %16 = tpu.matmul %14, %15, %cst_14 {dimension_numbers = #tpu.dot_dimension_numbers<[1], [0], [0], [1], [0, 0, 1, 1], [], []>} : vector<8x128xf32>, vector<128x6xf32>, vector<8x6xf32> -> vector<8x6xf32>
    %c0_15 = arith.constant 0 : index
    %c0_16 = arith.constant 0 : index
    %17 = vector.load %arg7[%c0_15, %c0_16] : memref<1x6xf32, #tpu.memory_space<vmem>>, vector<1x6xf32>
    %18 = vector.broadcast %17 : vector<1x6xf32> to vector<8x6xf32>
    %19 = arith.addf %16, %18 : vector<8x6xf32>
    %c0_17 = arith.constant 0 : index
    %c0_18 = arith.constant 0 : index
    %20 = vector.load %arg8[%c0_17, %c0_18] : memref<8x6xf32, #tpu.memory_space<vmem>>, vector<8x6xf32>
    tpu.vector_store %arg8[%c0_17, %c0_18], %19 {strides = array<i32>} : memref<8x6xf32, #tpu.memory_space<vmem>>, vector<8x6xf32>,
    return
  }
  func.func @transform_0(%arg0: i32) -> (i32, i32) {
    %c0_i32 = arith.constant 0 : i32
    %c0_i32_0 = arith.constant 0 : i32
    return %arg0, %c0_i32 : i32, i32
  }
  func.func @transform_1(%arg0: i32) -> (i32, i32) {
    %c0_i32 = arith.constant 0 : i32
    %c0_i32_0 = arith.constant 0 : i32
    %c0_i32_1 = arith.constant 0 : i32
    return %c0_i32, %c0_i32_0 : i32, i32
  }
  func.func @transform_2(%arg0: i32) -> (i32, i32) {
    %c0_i32 = arith.constant 0 : i32
    %c0_i32_0 = arith.constant 0 : i32
    %c0_i32_1 = arith.constant 0 : i32
    return %c0_i32, %c0_i32_0 : i32, i32
  }
  func.func @transform_3(%arg0: i32) -> (i32, i32) {
    %c0_i32 = arith.constant 0 : i32
    %c0_i32_0 = arith.constant 0 : i32
    %c0_i32_1 = arith.constant 0 : i32
    return %c0_i32, %c0_i32_0 : i32, i32
  }
  func.func @transform_4(%arg0: i32) -> (i32, i32) {
    %c0_i32 = arith.constant 0 : i32
    %c0_i32_0 = arith.constant 0 : i32
    %c0_i32_1 = arith.constant 0 : i32
    return %c0_i32, %c0_i32_0 : i32, i32
  }
  func.func @transform_5(%arg0: i32) -> (i32, i32) {
    %c0_i32 = arith.constant 0 : i32
    %c0_i32_0 = arith.constant 0 : i32
    %c0_i32_1 = arith.constant 0 : i32
    return %c0_i32, %c0_i32_0 : i32, i32
  }
  func.func @transform_6(%arg0: i32) -> (i32, i32) {
    %c0_i32 = arith.constant 0 : i32
    %c0_i32_0 = arith.constant 0 : i32
    %c0_i32_1 = arith.constant 0 : i32
    return %c0_i32, %c0_i32_0 : i32, i32
  }
  func.func @transform_7(%arg0: i32) -> (i32, i32) {
    %c0_i32 = arith.constant 0 : i32
    %c0_i32_0 = arith.constant 0 : i32
    return %arg0, %c0_i32 : i32, i32
  }
}

</mosaic_0001>

<llo_original>
// kernel: dqn_forward.1
$region0: #{dqn_forward.1}
  #allocation0 [shape = 'u32[]', space=smem, size = 0x4, offset = 0x4, fixed_abs, tag = 'smem constant byte address 0x4 - core index']
  #allocation1 [shape = 'u32[144,128]{1,0:T(1,128)}', space=vmem, size = 0x12000, scoped, tag = 'internal scratch']
  %s0 = inlined_call_operand.vmem [shape: f32[8,12], index: 0, kind: input, shape index: {}]
  %s1 = inlined_call_operand.vmem [shape: f32[12,64], index: 1, kind: input, shape index: {}]
  %s2 = inlined_call_operand.vmem [shape: f32[1,64], index: 2, kind: input, shape index: {}]
  %s3 = inlined_call_operand.vmem [shape: f32[64,128], index: 3, kind: input, shape index: {}]
  %s4 = inlined_call_operand.vmem [shape: f32[1,128], index: 4, kind: input, shape index: {}]
  %s5 = inlined_call_operand.vmem [shape: f32[128,6], index: 5, kind: input, shape index: {}]
  %s6 = inlined_call_operand.vmem [shape: f32[1,6], index: 6, kind: input, shape index: {}]
  %s7 = inlined_call_operand.vmem [shape: f32[8,6], index: 7, kind: output, shape index: {}]
  %s8 = sld [smem:[#allocation0]]
  $region38: #{dqn_forward.1} parent=0
    _
  %s10 = ssub.s32 1, %s8
  %s11 = scalar_select 0, %s10, %s8
  // Predicated region
  $region2: #{dqn_forward.1} parent=0 // pred_check
    _
  $region3: #{dqn_forward.1} parent=0 // pred_check_branch
    %13 = sbr.rel (0) target = $region5
  $region4: #{dqn_forward.1} parent=0 // pred_region
    _
  $region5: #{dqn_forward.1} parent=0 // pred_fallthru
    _
  // Predicated region
  $region6: #{dqn_forward.1} parent=0 // pred_check
    _
  $region7: #{dqn_forward.1} parent=0 // pred_check_branch
    %15 = sbr.rel (0) target = $region9
  $region8: #{dqn_forward.1} parent=0 // pred_region
    _
  $region9: #{dqn_forward.1} parent=0 // pred_fallthru
    _
  // Predicated region
  $region10: #{dqn_forward.1} parent=0 // pred_check
    _
  $region11: #{dqn_forward.1} parent=0 // pred_check_branch
    %17 = sbr.rel (0) target = $region13
  $region12: #{dqn_forward.1} parent=0 // pred_region
    _
  $region13: #{dqn_forward.1} parent=0 // pred_fallthru
    _
  // Predicated region
  $region14: #{dqn_forward.1} parent=0 // pred_check
    _
  $region15: #{dqn_forward.1} parent=0 // pred_check_branch
    %19 = sbr.rel (0) target = $region17
  $region16: #{dqn_forward.1} parent=0 // pred_region
    _
  $region17: #{dqn_forward.1} parent=0 // pred_fallthru
    _
  // Predicated region
  $region18: #{dqn_forward.1} parent=0 // pred_check
    _
  $region19: #{dqn_forward.1} parent=0 // pred_check_branch
    %21 = sbr.rel (0) target = $region21
  $region20: #{dqn_forward.1} parent=0 // pred_region
    _
  $region21: #{dqn_forward.1} parent=0 // pred_fallthru
    _
  // Predicated region
  $region22: #{dqn_forward.1} parent=0 // pred_check
    _
  $region23: #{dqn_forward.1} parent=0 // pred_check_branch
    %23 = sbr.rel (0) target = $region25
  $region24: #{dqn_forward.1} parent=0 // pred_region
    _
  $region25: #{dqn_forward.1} parent=0 // pred_fallthru
    _
  // Predicated region
  $region26: #{dqn_forward.1} parent=0 // pred_check
    _
  $region27: #{dqn_forward.1} parent=0 // pred_check_branch
    %25 = sbr.rel (0) target = $region29
  $region28: #{dqn_forward.1} parent=0 // pred_region
    _
  $region29: #{dqn_forward.1} parent=0 // pred_fallthru
    _
  %v26 = vld [vmem:[%s0] sm:$0xff]
  %v27 = vld [vmem:[%s1] sm:$0xff]
  %v28 = vld [vmem:[%s1 + $0x8] sm:$0xf]
  %v29 = vld [vmem:[%s2] sm:$0x1]
  %v31 = vlaneseq
  %v32 = vshrl.u32 %v31, 7
  %v33 = vsub.s32 0, %v32
  %v34 = vrot.slane %v29, %v33
  %vm36 = vcmask 97280
  %v38 = vsel %vm36, %v26, 0
  %vm40 = vcmask 1043456
  %v42 = vsel %vm40, %v28, 0
  %44 = vmatprep.subr.mxu0 0.0
  %45 = vmatpush1.msra.mxu0 %v27
  %46 = vmatprep.subr.mxu0 0.0
  %47 = vmatpush1.msra.mxu0 %v42
  %48 = vmatprep.subr.mxu0 0.0
  %49 = vmatpush1.msra.mxu0 0.0
  %50 = vmatprep.subr.mxu0 0.0
  %51 = vmatpush1.msra.mxu0 0.0
  %52 = vmatprep.subr.mxu0 0.0
  %53 = vmatpush1.msra.mxu0 0.0
  %54 = vmatprep.subr.mxu0 0.0
  %55 = vmatpush1.msra.mxu0 0.0
  %56 = vmatprep.subr.mxu0 0.0
  %57 = vmatpush1.msra.mxu0 0.0
  %58 = vmatprep.subr.mxu0 0.0
  %59 = vmatpush1.msra.mxu0 0.0
  %60 = vmatprep.subr.mxu0 0.0
  %61 = vmatpush1.msra.mxu0 0.0
  %62 = vmatprep.subr.mxu0 0.0
  %63 = vmatpush1.msra.mxu0 0.0
  %64 = vmatprep.subr.mxu0 0.0
  %65 = vmatpush1.msra.mxu0 0.0
  %66 = vmatprep.subr.mxu0 0.0
  %67 = vmatpush1.msra.mxu0 0.0
  %68 = vmatprep.subr.mxu0 0.0
  %69 = vmatpush1.msra.mxu0 0.0
  %70 = vmatprep.subr.mxu0 0.0
  %71 = vmatpush1.msra.mxu0 0.0
  %72 = vmatprep.subr.mxu0 0.0
  %73 = vmatpush1.msra.mxu0 0.0
  %74 = vmatprep.subr.mxu0 0.0
  %75 = vmatpush1.msra.mxu0 0.0
  %76 = vmatprep.subr.mxu0 0.0
  %77 = vmatpush1.msra.mxu0 0.0
  %78 = vmatprep.subr.mxu0 0.0
  %79 = vmatpush1.msra.mxu0 0.0
  %80 = vmatprep.subr.mxu0 0.0
  %81 = vmatpush1.msra.mxu0 0.0
  %82 = vmatprep.subr.mxu0 0.0
  %83 = vmatpush1.msra.mxu0 0.0
  %84 = vmatprep.subr.mxu0 0.0
  %85 = vmatpush1.msra.mxu0 0.0
  %86 = vmatprep.subr.mxu0 0.0
  %87 = vmatpush1.msra.mxu0 0.0
  %88 = vmatprep.subr.mxu0 0.0
  %89 = vmatpush1.msra.mxu0 0.0
  %90 = vmatprep.subr.mxu0 0.0
  %91 = vmatpush1.msra.mxu0 0.0
  %92 = vmatprep.subr.mxu0 0.0
  %93 = vmatpush1.msra.mxu0 0.0
  %94 = vmatprep.subr.mxu0 0.0
  %95 = vmatpush1.msra.mxu0 0.0
  %96 = vmatprep.subr.mxu0 0.0
  %97 = vmatpush1.msra.mxu0 0.0
  %98 = vmatprep.subr.mxu0 0.0
  %99 = vmatpush1.msra.mxu0 0.0
  %100 = vmatprep.subr.mxu0 0.0
  %101 = vmatpush1.msra.mxu0 0.0
  %102 = vmatprep.subr.mxu0 0.0
  %103 = vmatpush1.msra.mxu0 0.0
  %104 = vmatprep.subr.mxu0 0.0
  %105 = vmatpush1.msra.mxu0 0.0
  %106 = vmatprep.subr.mxu0 0.0
  %107 = vmatpush1.msra.mxu0 0.0
  %108 = vmatprep.mubr.f32.mxu0 0.0
  %109 = vmatmul.mubr.f32.gmra.mrb[0].mxu0 %v38
  %v110 = vpop.f32.mrb[0].mxu0
  %v111 = vadd.f32 %v34, %v110
  %v112 = vpop.f32.mrb[0].mxu0
  %113 = vdwg.mxu0
  %v114 = vmax.f32 %v111, 0.0
  %v115 = vld [vmem:[%s3] sm:$0xff]
  %v116 = vld [vmem:[%s3 + $0x8] sm:$0xff]
  %v117 = vld [vmem:[%s3 + $0x10] sm:$0xff]
  %v118 = vld [vmem:[%s3 + $0x18] sm:$0xff]
  %v119 = vld [vmem:[%s3 + $0x20] sm:$0xff]
  %v120 = vld [vmem:[%s3 + $0x28] sm:$0xff]
  %v121 = vld [vmem:[%s3 + $0x30] sm:$0xff]
  %v122 = vld [vmem:[%s3 + $0x38] sm:$0xff]
  %v123 = vld [vmem:[%s4] sm:$0x1]
  %v125 = vlaneseq
  %v126 = vshrl.u32 %v125, 7
  %v127 = vsub.s32 0, %v126
  %v128 = vrot.slane %v123, %v127
  %vm130 = vcmask 523264
  %v132 = vsel %vm130, %v114, 0
  %134 = vmatprep.subr.mxu0 0.0
  %135 = vmatpush1.msra.mxu0 %v115
  %136 = vmatprep.subr.mxu0 0.0
  %137 = vmatpush1.msra.mxu0 %v116
  %138 = vmatprep.subr.mxu0 0.0
  %139 = vmatpush1.msra.mxu0 %v117
  %140 = vmatprep.subr.mxu0 0.0
  %141 = vmatpush1.msra.mxu0 %v118
  %142 = vmatprep.subr.mxu0 0.0
  %143 = vmatpush1.msra.mxu0 %v119
  %144 = vmatprep.subr.mxu0 0.0
  %145 = vmatpush1.msra.mxu0 %v120
  %146 = vmatprep.subr.mxu0 0.0
  %147 = vmatpush1.msra.mxu0 %v121
  %148 = vmatprep.subr.mxu0 0.0
  %149 = vmatpush1.msra.mxu0 %v122
  %150 = vmatprep.subr.mxu0 0.0
  %151 = vmatpush1.msra.mxu0 0.0
  %152 = vmatprep.subr.mxu0 0.0
  %153 = vmatpush1.msra.mxu0 0.0
  %154 = vmatprep.subr.mxu0 0.0
  %155 = vmatpush1.msra.mxu0 0.0
  %156 = vmatprep.subr.mxu0 0.0
  %157 = vmatpush1.msra.mxu0 0.0
  %158 = vmatprep.subr.mxu0 0.0
  %159 = vmatpush1.msra.mxu0 0.0
  %160 = vmatprep.subr.mxu0 0.0
  %161 = vmatpush1.msra.mxu0 0.0
  %162 = vmatprep.subr.mxu0 0.0
  %163 = vmatpush1.msra.mxu0 0.0
  %164 = vmatprep.subr.mxu0 0.0
  %165 = vmatpush1.msra.mxu0 0.0
  %166 = vmatprep.subr.mxu0 0.0
  %167 = vmatpush1.msra.mxu0 0.0
  %168 = vmatprep.subr.mxu0 0.0
  %169 = vmatpush1.msra.mxu0 0.0
  %170 = vmatprep.subr.mxu0 0.0
  %171 = vmatpush1.msra.mxu0 0.0
  %172 = vmatprep.subr.mxu0 0.0
  %173 = vmatpush1.msra.mxu0 0.0
  %174 = vmatprep.subr.mxu0 0.0
  %175 = vmatpush1.msra.mxu0 0.0
  %176 = vmatprep.subr.mxu0 0.0
  %177 = vmatpush1.msra.mxu0 0.0
  %178 = vmatprep.subr.mxu0 0.0
  %179 = vmatpush1.msra.mxu0 0.0
  %180 = vmatprep.subr.mxu0 0.0
  %181 = vmatpush1.msra.mxu0 0.0
  %182 = vmatprep.subr.mxu0 0.0
  %183 = vmatpush1.msra.mxu0 0.0
  %184 = vmatprep.subr.mxu0 0.0
  %185 = vmatpush1.msra.mxu0 0.0
  %186 = vmatprep.subr.mxu0 0.0
  %187 = vmatpush1.msra.mxu0 0.0
  %188 = vmatprep.subr.mxu0 0.0
  %189 = vmatpush1.msra.mxu0 0.0
  %190 = vmatprep.subr.mxu0 0.0
  %191 = vmatpush1.msra.mxu0 0.0
  %192 = vmatprep.subr.mxu0 0.0
  %193 = vmatpush1.msra.mxu0 0.0
  %194 = vmatprep.subr.mxu0 0.0
  %195 = vmatpush1.msra.mxu0 0.0
  %196 = vmatprep.subr.mxu0 0.0
  %197 = vmatpush1.msra.mxu0 0.0
  %198 = vmatprep.mubr.f32.mxu0 0.0
  %199 = vmatmul.mubr.f32.gmra.mrb[0].mxu0 %v132
  %v200 = vpop.f32.mrb[0].mxu0
  %v201 = vadd.f32 %v128, %v200
  %v202 = vpop.f32.mrb[0].mxu0
  %203 = vdwg.mxu0
  %v204 = vmax.f32 %v201, 0.0
  %v205 = vld [vmem:[%s5] sm:$0xff]
  %v206 = vld [vmem:[%s5 + $0x8] sm:$0xff]
  %v207 = vld [vmem:[%s5 + $0x10] sm:$0xff]
  %v208 = vld [vmem:[%s5 + $0x18] sm:$0xff]
  %v209 = vld [vmem:[%s5 + $0x20] sm:$0xff]
  %v210 = vld [vmem:[%s5 + $0x28] sm:$0xff]
  %v211 = vld [vmem:[%s5 + $0x30] sm:$0xff]
  %v212 = vld [vmem:[%s5 + $0x38] sm:$0xff]
  %v213 = vld [vmem:[%s5 + $0x40] sm:$0xff]
  %v214 = vld [vmem:[%s5 + $0x48] sm:$0xff]
  %v215 = vld [vmem:[%s5 + $0x50] sm:$0xff]
  %v216 = vld [vmem:[%s5 + $0x58] sm:$0xff]
  %v217 = vld [vmem:[%s5 + $0x60] sm:$0xff]
  %v218 = vld [vmem:[%s5 + $0x68] sm:$0xff]
  %v219 = vld [vmem:[%s5 + $0x70] sm:$0xff]
  %v220 = vld [vmem:[%s5 + $0x78] sm:$0xff]
  %v221 = vld [vmem:[%s6] sm:$0x1]
  %v223 = vlaneseq
  %v224 = vshrl.u32 %v223, 7
  %v225 = vsub.s32 0, %v224
  %v226 = vrot.slane %v221, %v225
  %228 = vmatprep.subr.mxu0 0.0
  %229 = vmatpush1.msra.mxu0 %v205
  %230 = vmatprep.subr.mxu0 0.0
  %231 = vmatpush1.msra.mxu0 %v206
  %232 = vmatprep.subr.mxu0 0.0
  %233 = vmatpush1.msra.mxu0 %v207
  %234 = vmatprep.subr.mxu0 0.0
  %235 = vmatpush1.msra.mxu0 %v208
  %236 = vmatprep.subr.mxu0 0.0
  %237 = vmatpush1.msra.mxu0 %v209
  %238 = vmatprep.subr.mxu0 0.0
  %239 = vmatpush1.msra.mxu0 %v210
  %240 = vmatprep.subr.mxu0 0.0
  %241 = vmatpush1.msra.mxu0 %v211
  %242 = vmatprep.subr.mxu0 0.0
  %243 = vmatpush1.msra.mxu0 %v212
  %244 = vmatprep.subr.mxu0 0.0
  %245 = vmatpush1.msra.mxu0 %v213
  %246 = vmatprep.subr.mxu0 0.0
  %247 = vmatpush1.msra.mxu0 %v214
  %248 = vmatprep.subr.mxu0 0.0
  %249 = vmatpush1.msra.mxu0 %v215
  %250 = vmatprep.subr.mxu0 0.0
  %251 = vmatpush1.msra.mxu0 %v216
  %252 = vmatprep.subr.mxu0 0.0
  %253 = vmatpush1.msra.mxu0 %v217
  %254 = vmatprep.subr.mxu0 0.0
  %255 = vmatpush1.msra.mxu0 %v218
  %256 = vmatprep.subr.mxu0 0.0
  %257 = vmatpush1.msra.mxu0 %v219
  %258 = vmatprep.subr.mxu0 0.0
  %259 = vmatpush1.msra.mxu0 %v220
  %260 = vmatprep.subr.mxu0 0.0
  %261 = vmatpush1.msra.mxu0 0.0
  %262 = vmatprep.subr.mxu0 0.0
  %263 = vmatpush1.msra.mxu0 0.0
  %264 = vmatprep.subr.mxu0 0.0
  %265 = vmatpush1.msra.mxu0 0.0
  %266 = vmatprep.subr.mxu0 0.0
  %267 = vmatpush1.msra.mxu0 0.0
  %268 = vmatprep.subr.mxu0 0.0
  %269 = vmatpush1.msra.mxu0 0.0
  %270 = vmatprep.subr.mxu0 0.0
  %271 = vmatpush1.msra.mxu0 0.0
  %272 = vmatprep.subr.mxu0 0.0
  %273 = vmatpush1.msra.mxu0 0.0
  %274 = vmatprep.subr.mxu0 0.0
  %275 = vmatpush1.msra.mxu0 0.0
  %276 = vmatprep.subr.mxu0 0.0
  %277 = vmatpush1.msra.mxu0 0.0
  %278 = vmatprep.subr.mxu0 0.0
  %279 = vmatpush1.msra.mxu0 0.0
  %280 = vmatprep.subr.mxu0 0.0
  %281 = vmatpush1.msra.mxu0 0.0
  %282 = vmatprep.subr.mxu0 0.0
  %283 = vmatpush1.msra.mxu0 0.0
  %284 = vmatprep.subr.mxu0 0.0
  %285 = vmatpush1.msra.mxu0 0.0
  %286 = vmatprep.subr.mxu0 0.0
  %287 = vmatpush1.msra.mxu0 0.0
  %288 = vmatprep.subr.mxu0 0.0
  %289 = vmatpush1.msra.mxu0 0.0
  %290 = vmatprep.subr.mxu0 0.0
  %291 = vmatpush1.msra.mxu0 0.0
  %292 = vmatprep.mubr.f32.mxu0 0.0
  %293 = vmatmul.mubr.f32.gmra.mrb[0].mxu0 %v204
  %v294 = vpop.f32.mrb[0].mxu0
  %v295 = vadd.f32 %v226, %v294
  %v296 = vpop.f32.mrb[0].mxu0
  %297 = vdwg.mxu0
  %vm298 = vcmask 48128
  %299 = vst.msk [vmem:[%s7] sm:$0xff] %vm298, %v295
  // Predicated region
  $region30: #{dqn_forward.1} parent=0 // pred_check
    _
  $region31: #{dqn_forward.1} parent=0 // pred_check_branch
    %301 = sbr.rel (0) target = $region33
  $region32: #{dqn_forward.1} parent=0 // pred_region
    _
  $region33: #{dqn_forward.1} parent=0 // pred_fallthru
    _
  // Predicated region
  $region34: #{dqn_forward.1} parent=0 // pred_check
    _
  $region35: #{dqn_forward.1} parent=0 // pred_check_branch
    %303 = sbr.rel (0) target = $region37
  $region36: #{dqn_forward.1} parent=0 // pred_region
    _
  $region37: #{dqn_forward.1} parent=0 // pred_fallthru
    _

</llo_original>
